<compile_context>
chip_gen: v5e
topology: v5e:2x2
jax: 0.10.0
libtpu: 0.0.40
codegen_flags: <defaults>
</compile_context>

<pallas_src>
import functools

import numpy as np

import jax
import jax.numpy as jnp
from jax.experimental import pallas as pl
from jax.experimental.pallas import tpu as pltpu

_MIB = 1024 * 1024


def _round_up(x: int, m: int) -> int:
    return ((x + m - 1) // m) * m


def _cdiv(a: int, b: int) -> int:
    return (a + b - 1) // b


def _vmem_budget():
    """(scoped vmem clamp in bytes, physical vmem capacity in bytes)."""
    try:
        cap = int(pltpu.get_tpu_info().vmem_capacity_bytes)
    except Exception:
        cap = 64 * _MIB  # conservative (v7x-sized) fallback
    clamp = min(int(cap * 7 // 8), 110 * _MIB)  # 56 MiB on 64 MiB parts, 110 MiB on 128 MiB
    return clamp, cap


# ---------------------------------------------------------------------------
# Resident-weight fused kernel (the fast path).
# ---------------------------------------------------------------------------
def mlp_kernel(x_ref,
               w1_ref, b1_ref,
               w2_ref, b2_ref,
               w3_ref, b3_ref,
               w4_ref, b4_ref,
               o_ref):
    # All matmuls: bf16 operands on the MXU, f32 accumulation.
    h = jnp.dot(x_ref[...], w1_ref[...], preferred_element_type=jnp.float32)
    h = jnp.maximum(h + b1_ref[...], 0.0)
    h = jnp.dot(h.astype(jnp.bfloat16), w2_ref[...],
                preferred_element_type=jnp.float32)
    h = jnp.maximum(h + b2_ref[...], 0.0)
    h = jnp.dot(h.astype(jnp.bfloat16), w3_ref[...],
                preferred_element_type=jnp.float32)
    h = jnp.maximum(h + b3_ref[...], 0.0)
    out = jnp.dot(h.astype(jnp.bfloat16), w4_ref[...],
                  preferred_element_type=jnp.float32)
    o_ref[...] = (out + b4_ref[...]).astype(o_ref.dtype)


# ---------------------------------------------------------------------------
# Layered fallback: generic K-tiled Linear(+ReLU) kernel (P3 accumulator).
# Used when resident weights exceed the VMEM budget (large hidden_dim on v7x).
# ---------------------------------------------------------------------------
def _linear_kernel(x_ref, w_ref, b_ref, o_ref, acc_ref, *, relu):
    @pl.when(pl.program_id(2) == 0)
    def _():
        acc_ref[...] = jnp.zeros_like(acc_ref)

    acc_ref[...] += jnp.dot(x_ref[...], w_ref[...],
                            preferred_element_type=jnp.float32)

    @pl.when(pl.program_id(2) == pl.num_programs(2) - 1)
    def _():
        r = acc_ref[...] + b_ref[...]
        if relu:
            r = jnp.maximum(r, 0.0)
        o_ref[...] = r.astype(o_ref.dtype)


def _pick_tile(total: int, cap: int = 512) -> int:
    """Largest multiple-of-128 tile <= cap that divides `total` (total % 128 == 0)."""
    t = min(cap, total)
    while total % t:
        t -= 128
    return t


def _linear_layer(x, w, b, *, relu, out_dtype, tb, clamp):
    Bp, Kp = x.shape
    Np = w.shape[1]
    tk = _pick_tile(Kp)
    tn = _pick_tile(Np)
    grid = (Bp // tb, Np // tn, Kp // tk)

    need = (2 * tb * tk * x.dtype.itemsize          # x tile (double-buffered)
            + 2 * tk * tn * w.dtype.itemsize        # w tile (double-buffered)
            + 2 * tn * 4                            # bias tile
            + 2 * tb * tn * jnp.dtype(out_dtype).itemsize  # out tile
            + tb * tn * 4)                          # f32 accumulator scratch
    vmem_limit = int(min(clamp, max(2 * need, 32 * _MIB)))

    return pl.pallas_call(
        functools.partial(_linear_kernel, relu=relu),
        out_shape=jax.ShapeDtypeStruct((Bp, Np), out_dtype),
        grid=grid,
        in_specs=[
            pl.BlockSpec((tb, tk), lambda i, j, k: (i, k)),
            pl.BlockSpec((tk, tn), lambda i, j, k: (k, j)),
            pl.BlockSpec((1, tn), lambda i, j, k: (0, j)),
        ],
        out_specs=pl.BlockSpec((tb, tn), lambda i, j, k: (i, j)),
        scratch_shapes=[pltpu.VMEM((tb, tn), jnp.float32)],
        compiler_params=pltpu.CompilerParams(
            dimension_semantics=("parallel", "parallel", "arbitrary"),
            vmem_limit_bytes=vmem_limit),
    )(x, w, b)


# ---------------------------------------------------------------------------
# Wrapper.
# ---------------------------------------------------------------------------
def mlp_latent_prediction(zt, prepared_params, *, output_dim, seq_len,
                          force_layered=False):
    """zt: (B, input_dim, seq_len) float32 -> (B, output_dim, seq_len) float32."""
    B = zt.shape[0]
    x_flat = zt.reshape(B, -1)              # row-major flatten == torch.nn.Flatten
    in_feat = x_flat.shape[1]
    out_feat = output_dim * seq_len

    (w1, b1, w2, b2, w3, b3, w4, b4) = prepared_params
    in_p, hid_p = w1.shape                  # lane-padded sizes (multiples of 128)
    out_p = w4.shape[1]

    clamp, vmem_cap = _vmem_budget()

    # Resident footprint with single-buffered (Buffered(1)) weights/biases.
    weight_bytes = 2 * (in_p * hid_p + 2 * hid_p * hid_p + hid_p * out_p)
    bias_bytes = 4 * (3 * hid_p + out_p)
    resident_bytes = weight_bytes + bias_bytes

    def tile_bytes(tb, tn):
        io = 2 * tb * in_p * 2 + 2 * tb * tn * 4     # double-buffered x / out tiles
        inter = 3 * tb * max(hid_p, tn) * 4          # live f32 intermediates
        return io + inter

    use_layered = force_layered or (resident_bytes + tile_bytes(16, out_p) > clamp)

    if use_layered:
        # TODO(synk): a fused two-level pipeline (pltpu.emit_pipeline over HBM
        # weight tiles) would avoid the HBM round-trip of activations; the
        # layer-by-layer K-tiled path below keeps correctness for configs whose
        # weights don't fit VMEM-resident.
        tbl = _round_up(_cdiv(B, _cdiv(B, 256)), 16)
        B_pad = _round_up(B, tbl)
        x_pad = jnp.pad(x_flat.astype(jnp.bfloat16),
                        ((0, B_pad - B), (0, in_p - in_feat)))
        h = _linear_layer(x_pad, w1, b1, relu=True, out_dtype=jnp.bfloat16,
                          tb=tbl, clamp=clamp)
        h = _linear_layer(h, w2, b2, relu=True, out_dtype=jnp.bfloat16,
                          tb=tbl, clamp=clamp)
        h = _linear_layer(h, w3, b3, relu=True, out_dtype=jnp.bfloat16,
                          tb=tbl, clamp=clamp)
        out_padded = _linear_layer(h, w4, b4, relu=False, out_dtype=jnp.float32,
                                   tb=tbl, clamp=clamp)
        return out_padded[:B, :out_feat].reshape(B, output_dim, seq_len)

    # --- Resident-weight fused path ---------------------------------------
    # Batch tile: multiple of 16 (bf16 sublane packing), sized to minimize
    # round_up(B, TB) waste, capped per-generation (256 on 64 MiB parts).
    tb_max = 256 if vmem_cap <= 64 * _MIB else 512
    TB = _round_up(_cdiv(B, _cdiv(B, tb_max)), 16)
    while TB > 16 and resident_bytes + tile_bytes(TB, out_p) > clamp:
        TB = max(16, _round_up(TB // 2, 16))
    B_pad = _round_up(B, TB)
    n_b = B_pad // TB

    # Small batch (single batch step): split fc4's output columns over a
    # second parallel grid axis so both v7x TensorCores get work.
    n_n = 2 if (n_b == 1 and out_p >= 256 and out_p % 256 == 0) else 1
    TN = out_p // n_n

    x_pad = jnp.pad(x_flat.astype(jnp.bfloat16),
                    ((0, B_pad - B), (0, in_p - in_feat)))

    # VMEM accounting matching real pipeline allocation (weights 1x via
    # Buffered(1), x/out 2x, f32 intermediates), with 25% headroom.
    vmem_need = resident_bytes + tile_bytes(TB, TN)
    if n_n > 1:  # fc4 weight/bias double-buffered when tiled along N
        vmem_need += 2 * hid_p * TN * 2 + 2 * TN * 4
    vmem_limit = int(min(clamp, max(vmem_need + vmem_need // 4, 32 * _MIB)))

    flops = 2 * B_pad * (n_n * (in_p * hid_p + 2 * hid_p * hid_p)
                         + hid_p * out_p)
    bytes_accessed = (x_pad.size * 2 + weight_bytes + bias_bytes
                      + B_pad * out_p * 4)

    resident = dict(pipeline_mode=pl.Buffered(1))   # single-buffer constant blocks
    w4_mode = {} if n_n > 1 else resident

    out_padded = pl.pallas_call(
        mlp_kernel,
        out_shape=jax.ShapeDtypeStruct((B_pad, out_p), jnp.float32),
        grid=(n_b, n_n),
        in_specs=[
            pl.BlockSpec((TB, in_p), lambda i, j: (i, 0)),               # x (pipelined)
            pl.BlockSpec((in_p, hid_p), lambda i, j: (0, 0), **resident),  # w1
            pl.BlockSpec((1, hid_p), lambda i, j: (0, 0), **resident),     # b1
            pl.BlockSpec((hid_p, hid_p), lambda i, j: (0, 0), **resident),  # w2
            pl.BlockSpec((1, hid_p), lambda i, j: (0, 0), **resident),     # b2
            pl.BlockSpec((hid_p, hid_p), lambda i, j: (0, 0), **resident),  # w3
            pl.BlockSpec((1, hid_p), lambda i, j: (0, 0), **resident),     # b3
            pl.BlockSpec((hid_p, TN), lambda i, j: (0, j), **w4_mode),     # w4
            pl.BlockSpec((1, TN), lambda i, j: (0, j), **w4_mode),         # b4
        ],
        out_specs=pl.BlockSpec((TB, TN), lambda i, j: (i, j)),
        compiler_params=pltpu.CompilerParams(
            dimension_semantics=("parallel", "parallel"),
            vmem_limit_bytes=vmem_limit),
        cost_estimate=pl.CostEstimate(
            flops=flops, transcendentals=0, bytes_accessed=bytes_accessed),
    )(x_pad, w1, b1, w2, b2, w3, b3, w4, b4)

    # Strip batch + lane padding before the view, then reshape.
    return out_padded[:B, :out_feat].reshape(B, output_dim, seq_len)


# ---------------------------------------------------------------------------
# Parameter helpers (synthetic init matching nn.Linear shapes, lane padding).
# ---------------------------------------------------------------------------
def init_params(key, input_dim, hidden_dim, output_dim, seq_len):
    """Weights stored transposed (in_features, out_features), biases (1, out), f32."""
    in_feat = input_dim * seq_len
    out_feat = output_dim * seq_len
    dims = [(in_feat, hidden_dim),
            (hidden_dim, hidden_dim),
            (hidden_dim, hidden_dim),
            (hidden_dim, out_feat)]
    params = []
    for (din, dout) in dims:
        key, kw, kb = jax.random.split(key, 3)
        bound = 1.0 / jnp.sqrt(din)
        w_t = jax.random.uniform(kw, (din, dout), jnp.float32, -bound, bound)
        b = jax.random.uniform(kb, (1, dout), jnp.float32, -bound, bound)
        params.extend([w_t, b])
    return tuple(params)


def prepare_params(params, *, input_dim, hidden_dim, output_dim, seq_len):
    """Zero-pad feature dims to multiples of 128 and cast weights to bf16
    (biases stay f32).  Done once, outside the hot path."""
    in_feat = input_dim * seq_len
    out_feat = output_dim * seq_len
    in_p = _round_up(in_feat, 128)
    hid_p = _round_up(hidden_dim, 128)
    out_p = _round_up(out_feat, 128)

    (w1t, b1, w2t, b2, w3t, b3, w4t, b4) = params

    def pad2(a, rows, cols):
        return jnp.pad(a, ((0, rows - a.shape[0]), (0, cols - a.shape[1])))

    w1 = pad2(w1t, in_p, hid_p).astype(jnp.bfloat16)
    w2 = pad2(w2t, hid_p, hid_p).astype(jnp.bfloat16)
    w3 = pad2(w3t, hid_p, hid_p).astype(jnp.bfloat16)
    w4 = pad2(w4t, hid_p, out_p).astype(jnp.bfloat16)
    b1p = pad2(b1, 1, hid_p)
    b2p = pad2(b2, 1, hid_p)
    b3p = pad2(b3, 1, hid_p)
    b4p = pad2(b4, 1, out_p)
    return (w1, b1p, w2, b2p, w3, b3p, w4, b4p)


if __name__ == "__main__":
    B, input_dim, hidden_dim, output_dim, seq_len = 2, 4, 32, 4, 8

    key = jax.random.PRNGKey(0)
    key, kx = jax.random.split(key)
    zt = jax.random.normal(kx, (B, input_dim, seq_len), jnp.float32)

    raw_params = init_params(key, input_dim, hidden_dim, output_dim, seq_len)
    params = prepare_params(raw_params, input_dim=input_dim,
                            hidden_dim=hidden_dim, output_dim=output_dim,
                            seq_len=seq_len)

    fwd = jax.jit(functools.partial(mlp_latent_prediction,
                                    output_dim=output_dim, seq_len=seq_len))
    out = jax.block_until_ready(fwd(zt, params))
    assert out.shape == (B, output_dim, seq_len), out.shape
    assert out.dtype == jnp.float32

    # Pure-JAX f32 reference (loose tolerance: kernel uses bf16 MXU operands).
    (w1t, b1, w2t, b2, w3t, b3, w4t, b4) = raw_params
    x = zt.reshape(B, -1)
    h = jnp.maximum(x @ w1t + b1, 0.0)
    h = jnp.maximum(h @ w2t + b2, 0.0)
    h = jnp.maximum(h @ w3t + b3, 0.0)
    ref = (h @ w4t + b4).reshape(B, output_dim, seq_len)
    assert np.allclose(np.asarray(out), np.asarray(ref), rtol=1e-1, atol=1e-1), \
        float(np.max(np.abs(np.asarray(out) - np.asarray(ref))))

    # Also exercise the layered fallback path (used when weights don't fit VMEM).
    fwd_l = jax.jit(functools.partial(mlp_latent_prediction, output_dim=output_dim,
                                      seq_len=seq_len, force_layered=True))
    out_l = jax.block_until_ready(fwd_l(zt, params))
    assert np.allclose(np.asarray(out_l), np.asarray(out), rtol=1e-1, atol=1e-1)

    print("KERNEL_OK")
</pallas_src>

<mosaic_0001>
module attributes {stable_mosaic.version = 11 : i64} {
  func.func @mlp_kernel(%arg0: i32, %arg1: i32, %arg2: memref<16x128xbf16, #tpu.memory_space<vmem>>, %arg3: memref<128x128xbf16, #tpu.memory_space<vmem>>, %arg4: memref<1x128xf32, #tpu.memory_space<vmem>>, %arg5: memref<128x128xbf16, #tpu.memory_space<vmem>>, %arg6: memref<1x128xf32, #tpu.memory_space<vmem>>, %arg7: memref<128x128xbf16, #tpu.memory_space<vmem>>, %arg8: memref<1x128xf32, #tpu.memory_space<vmem>>, %arg9: memref<128x128xbf16, #tpu.memory_space<vmem>>, %arg10: memref<1x128xf32, #tpu.memory_space<vmem>>, %arg11: memref<16x128xf32, #tpu.memory_space<vmem>>) attributes {dimension_semantics = [#tpu.dimension_semantics<parallel>, #tpu.dimension_semantics<parallel>], iteration_bounds = array<i64: 1, 1>, scalar_prefetch = 0 : i64, scratch_operands = 0 : i64, tpu.core_type = #tpu.core_type<tc>, window_params = [{transform_indices = @transform_0, window_bounds = array<i64: 16, 128>}, {pipeline_mode = #tpu.pipeline_mode<synchronous>, transform_indices = @transform_1, window_bounds = array<i64: 128, 128>}, {pipeline_mode = #tpu.pipeline_mode<synchronous>, transform_indices = @transform_2, window_bounds = array<i64: 1, 128>}, {pipeline_mode = #tpu.pipeline_mode<synchronous>, transform_indices = @transform_3, window_bounds = array<i64: 128, 128>}, {pipeline_mode = #tpu.pipeline_mode<synchronous>, transform_indices = @transform_4, window_bounds = array<i64: 1, 128>}, {pipeline_mode = #tpu.pipeline_mode<synchronous>, transform_indices = @transform_5, window_bounds = array<i64: 128, 128>}, {pipeline_mode = #tpu.pipeline_mode<synchronous>, transform_indices = @transform_6, window_bounds = array<i64: 1, 128>}, {pipeline_mode = #tpu.pipeline_mode<synchronous>, transform_indices = @transform_7, window_bounds = array<i64: 128, 128>}, {pipeline_mode = #tpu.pipeline_mode<synchronous>, transform_indices = @transform_8, window_bounds = array<i64: 1, 128>}, {transform_indices = @transform_9, window_bounds = array<i64: 16, 128>}]} {
    %c0 = arith.constant 0 : index
    %c0_0 = arith.constant 0 : index
    %0 = vector.load %arg2[%c0, %c0_0] : memref<16x128xbf16, #tpu.memory_space<vmem>>, vector<16x128xbf16>
    %c0_1 = arith.constant 0 : index
    %c0_2 = arith.constant 0 : index
    %1 = vector.load %arg3[%c0_1, %c0_2] : memref<128x128xbf16, #tpu.memory_space<vmem>>, vector<128x128xbf16>
    %cst = arith.constant dense<0.000000e+00> : vector<16x128xf32>
    %2 = tpu.matmul %0, %1, %cst {dimension_numbers = #tpu.dot_dimension_numbers<[1], [0], [0], [1], [0, 0, 1, 1], [], []>} : vector<16x128xbf16>, vector<128x128xbf16>, vector<16x128xf32> -> vector<16x128xf32>
    %c0_3 = arith.constant 0 : index
    %c0_4 = arith.constant 0 : index
    %3 = vector.load %arg4[%c0_3, %c0_4] : memref<1x128xf32, #tpu.memory_space<vmem>>, vector<1x128xf32>
    %4 = vector.broadcast %3 : vector<1x128xf32> to vector<16x128xf32>
    %5 = arith.addf %2, %4 : vector<16x128xf32>
    %cst_5 = arith.constant 0.000000e+00 : f32
    %6 = vector.broadcast %cst_5 : f32 to vector<16x128xf32>
    %7 = arith.maximumf %5, %6 : vector<16x128xf32>
    %8 = arith.truncf %7 : vector<16x128xf32> to vector<16x128xbf16>
    %c0_6 = arith.constant 0 : index
    %c0_7 = arith.constant 0 : index
    %9 = vector.load %arg5[%c0_6, %c0_7] : memref<128x128xbf16, #tpu.memory_space<vmem>>, vector<128x128xbf16>
    %cst_8 = arith.constant dense<0.000000e+00> : vector<16x128xf32>
    %10 = tpu.matmul %8, %9, %cst_8 {dimension_numbers = #tpu.dot_dimension_numbers<[1], [0], [0], [1], [0, 0, 1, 1], [], []>} : vector<16x128xbf16>, vector<128x128xbf16>, vector<16x128xf32> -> vector<16x128xf32>
    %c0_9 = arith.constant 0 : index
    %c0_10 = arith.constant 0 : index
    %11 = vector.load %arg6[%c0_9, %c0_10] : memref<1x128xf32, #tpu.memory_space<vmem>>, vector<1x128xf32>
    %12 = vector.broadcast %11 : vector<1x128xf32> to vector<16x128xf32>
    %13 = arith.addf %10, %12 : vector<16x128xf32>
    %cst_11 = arith.constant 0.000000e+00 : f32
    %14 = vector.broadcast %cst_11 : f32 to vector<16x128xf32>
    %15 = arith.maximumf %13, %14 : vector<16x128xf32>
    %16 = arith.truncf %15 : vector<16x128xf32> to vector<16x128xbf16>
    %c0_12 = arith.constant 0 : index
    %c0_13 = arith.constant 0 : index
    %17 = vector.load %arg7[%c0_12, %c0_13] : memref<128x128xbf16, #tpu.memory_space<vmem>>, vector<128x128xbf16>
    %cst_14 = arith.constant dense<0.000000e+00> : vector<16x128xf32>
    %18 = tpu.matmul %16, %17, %cst_14 {dimension_numbers = #tpu.dot_dimension_numbers<[1], [0], [0], [1], [0, 0, 1, 1], [], []>} : vector<16x128xbf16>, vector<128x128xbf16>, vector<16x128xf32> -> vector<16x128xf32>
    %c0_15 = arith.constant 0 : index
    %c0_16 = arith.constant 0 : index
    %19 = vector.load %arg8[%c0_15, %c0_16] : memref<1x128xf32, #tpu.memory_space<vmem>>, vector<1x128xf32>
    %20 = vector.broadcast %19 : vector<1x128xf32> to vector<16x128xf32>
    %21 = arith.addf %18, %20 : vector<16x128xf32>
    %cst_17 = arith.constant 0.000000e+00 : f32
    %22 = vector.broadcast %cst_17 : f32 to vector<16x128xf32>
    %23 = arith.maximumf %21, %22 : vector<16x128xf32>
    %24 = arith.truncf %23 : vector<16x128xf32> to vector<16x128xbf16>
    %c0_18 = arith.constant 0 : index
    %c0_19 = arith.constant 0 : index
    %25 = vector.load %arg9[%c0_18, %c0_19] : memref<128x128xbf16, #tpu.memory_space<vmem>>, vector<128x128xbf16>
    %cst_20 = arith.constant dense<0.000000e+00> : vector<16x128xf32>
    %26 = tpu.matmul %24, %25, %cst_20 {dimension_numbers = #tpu.dot_dimension_numbers<[1], [0], [0], [1], [0, 0, 1, 1], [], []>} : vector<16x128xbf16>, vector<128x128xbf16>, vector<16x128xf32> -> vector<16x128xf32>
    %c0_21 = arith.constant 0 : index
    %c0_22 = arith.constant 0 : index
    %27 = vector.load %arg10[%c0_21, %c0_22] : memref<1x128xf32, #tpu.memory_space<vmem>>, vector<1x128xf32>
    %28 = vector.broadcast %27 : vector<1x128xf32> to vector<16x128xf32>
    %29 = arith.addf %26, %28 : vector<16x128xf32>
    %c0_23 = arith.constant 0 : index
    %c0_24 = arith.constant 0 : index
    %30 = vector.load %arg11[%c0_23, %c0_24] : memref<16x128xf32, #tpu.memory_space<vmem>>, vector<16x128xf32>
    tpu.vector_store %arg11[%c0_23, %c0_24], %29 {strides = array<i32>} : memref<16x128xf32, #tpu.memory_space<vmem>>, vector<16x128xf32>,
    return
  }
  func.func @transform_0(%arg0: i32, %arg1: i32) -> (i32, i32) {
    %c0_i32 = arith.constant 0 : i32
    %c0_i32_0 = arith.constant 0 : i32
    return %arg0, %c0_i32 : i32, i32
  }
  func.func @transform_1(%arg0: i32, %arg1: i32) -> (i32, i32) {
    %c0_i32 = arith.constant 0 : i32
    %c0_i32_0 = arith.constant 0 : i32
    %c0_i32_1 = arith.constant 0 : i32
    return %c0_i32, %c0_i32_0 : i32, i32
  }
  func.func @transform_2(%arg0: i32, %arg1: i32) -> (i32, i32) {
    %c0_i32 = arith.constant 0 : i32
    %c0_i32_0 = arith.constant 0 : i32
    %c0_i32_1 = arith.constant 0 : i32
    return %c0_i32, %c0_i32_0 : i32, i32
  }
  func.func @transform_3(%arg0: i32, %arg1: i32) -> (i32, i32) {
    %c0_i32 = arith.constant 0 : i32
    %c0_i32_0 = arith.constant 0 : i32
    %c0_i32_1 = arith.constant 0 : i32
    return %c0_i32, %c0_i32_0 : i32, i32
  }
  func.func @transform_4(%arg0: i32, %arg1: i32) -> (i32, i32) {
    %c0_i32 = arith.constant 0 : i32
    %c0_i32_0 = arith.constant 0 : i32
    %c0_i32_1 = arith.constant 0 : i32
    return %c0_i32, %c0_i32_0 : i32, i32
  }
  func.func @transform_5(%arg0: i32, %arg1: i32) -> (i32, i32) {
    %c0_i32 = arith.constant 0 : i32
    %c0_i32_0 = arith.constant 0 : i32
    %c0_i32_1 = arith.constant 0 : i32
    return %c0_i32, %c0_i32_0 : i32, i32
  }
  func.func @transform_6(%arg0: i32, %arg1: i32) -> (i32, i32) {
    %c0_i32 = arith.constant 0 : i32
    %c0_i32_0 = arith.constant 0 : i32
    %c0_i32_1 = arith.constant 0 : i32
    return %c0_i32, %c0_i32_0 : i32, i32
  }
  func.func @transform_7(%arg0: i32, %arg1: i32) -> (i32, i32) {
    %c0_i32 = arith.constant 0 : i32
    %c0_i32_0 = arith.constant 0 : i32
    return %c0_i32, %arg1 : i32, i32
  }
  func.func @transform_8(%arg0: i32, %arg1: i32) -> (i32, i32) {
    %c0_i32 = arith.constant 0 : i32
    %c0_i32_0 = arith.constant 0 : i32
    return %c0_i32, %arg1 : i32, i32
  }
  func.func @transform_9(%arg0: i32, %arg1: i32) -> (i32, i32) {
    %c0_i32 = arith.constant 0 : i32
    return %arg0, %arg1 : i32, i32
  }
}

</mosaic_0001>

<llo_original>
// kernel: mlp_latent_prediction.1
$region0: #{mlp_latent_prediction.1}
  #allocation0 [shape = 'u32[]', space=smem, size = 0x4, offset = 0x4, fixed_abs, tag = 'smem constant byte address 0x4 - core index']
  #allocation1 [shape = 'u32[72,128]{1,0:T(1,128)}', space=vmem, size = 0x9000, scoped, tag = 'internal scratch']
  %s0 = inlined_call_operand.vmem [shape: bf16[16,128], index: 0, kind: input, shape index: {}]
  %s1 = inlined_call_operand.hbm [shape: bf16[128,128], index: 1, kind: input, shape index: {}]
  %s2 = inlined_call_operand.vmem [shape: f32[1,128], index: 2, kind: input, shape index: {}]
  %s3 = inlined_call_operand.hbm [shape: bf16[128,128], index: 3, kind: input, shape index: {}]
  %s4 = inlined_call_operand.vmem [shape: f32[1,128], index: 4, kind: input, shape index: {}]
  %s5 = inlined_call_operand.hbm [shape: bf16[128,128], index: 5, kind: input, shape index: {}]
  %s6 = inlined_call_operand.vmem [shape: f32[1,128], index: 6, kind: input, shape index: {}]
  %s7 = inlined_call_operand.hbm [shape: bf16[128,128], index: 7, kind: input, shape index: {}]
  %s8 = inlined_call_operand.vmem [shape: f32[1,128], index: 8, kind: input, shape index: {}]
  %s9 = inlined_call_operand.vmem [shape: f32[16,128], index: 9, kind: output, shape index: {}]
  %s10 = sld [smem:[#allocation0]]
  $region62: #{mlp_latent_prediction.1} parent=0
    _
  %s12 = ssub.s32 1, %s10
  %s13 = scalar_select 0, %s12, %s10
  $region1: #{mlp_latent_prediction.1} parent=0
    #allocation2 [shape = 'u8[32768]{0}', space=vmem, size = 0x8000, scoped, tag = 'input window, operand 1, single buffered']
    #allocation3 [shape = 's32[1]{0}', space=sflag, size = 0x4, scoped, tag = 'scoped memory for mlp_latent_prediction.1']
    #allocation4 [shape = 'u8[32768]{0}', space=vmem, size = 0x8000, scoped, tag = 'input window, operand 3, single buffered']
    #allocation5 [shape = 's32[1]{0}', space=sflag, size = 0x4, scoped, tag = 'scoped memory for mlp_latent_prediction.1']
    #allocation6 [shape = 'u8[32768]{0}', space=vmem, size = 0x8000, scoped, tag = 'input window, operand 5, single buffered']
    #allocation7 [shape = 'u8[32768]{0}', space=vmem, size = 0x8000, scoped, tag = 'input window, operand 7, single buffered']
    #allocation8 [shape = 's32[1]{0}', space=sflag, size = 0x4, scoped, tag = 'scoped memory for mlp_latent_prediction.1']
    %14 = vsyncpa [#allocation3], 0
    %15 = vsyncpa [#allocation5], 0
    %16 = vsyncpa [#allocation8], 0
    // Predicated region
    $region2: #{mlp_latent_prediction.1} parent=1 // pred_check
      _
    $region3: #{mlp_latent_prediction.1} parent=1 // pred_check_branch
      %18 = sbr.rel (0) target = $region5
    $region4: #{mlp_latent_prediction.1} parent=1 // pred_region
      _
    $region5: #{mlp_latent_prediction.1} parent=1 // pred_fallthru
      _
    // Predicated region
    $region6: #{mlp_latent_prediction.1} parent=1 // pred_check
      _
    $region7: #{mlp_latent_prediction.1} parent=1 // pred_check_branch
      %20 = sbr.rel (0) target = $region9
    $region8: #{mlp_latent_prediction.1} parent=1 // pred_region
      %22 = vsyncadd [#allocation3], 0
      %s23 = sshll.u32 %s1, 4
      %s24 = int_to_ptr.hbm [resolvable:$true] %s23
      %s25 = sshll.u32 [#allocation2], 4
      %s26 = int_to_ptr.vmem [resolvable:$true] %s25
      %31 = dma.hbm_to_vmem [thread:$0]  %s24, 1024, %s26, [#allocation3], 64, 64, 4
    $region9: #{mlp_latent_prediction.1} parent=1 // pred_fallthru
      _
    // Predicated region
    $region10: #{mlp_latent_prediction.1} parent=1 // pred_check
      _
    $region11: #{mlp_latent_prediction.1} parent=1 // pred_check_branch
      %33 = sbr.rel (0) target = $region13
    $region12: #{mlp_latent_prediction.1} parent=1 // pred_region
      _
    $region13: #{mlp_latent_prediction.1} parent=1 // pred_fallthru
      _
    // Predicated region
    $region14: #{mlp_latent_prediction.1} parent=1 // pred_check
      _
    $region15: #{mlp_latent_prediction.1} parent=1 // pred_check_branch
      %35 = sbr.rel (0) target = $region17
    $region16: #{mlp_latent_prediction.1} parent=1 // pred_region
      %37 = vsyncadd [#allocation5], 0
      %s38 = sshll.u32 %s3, 4
      %s39 = int_to_ptr.hbm [resolvable:$true] %s38
      %s40 = sshll.u32 [#allocation4], 4
      %s41 = int_to_ptr.vmem [resolvable:$true] %s40
      %46 = dma.hbm_to_vmem [thread:$0]  %s39, 1024, %s41, [#allocation5], 64, 64, 4
    $region17: #{mlp_latent_prediction.1} parent=1 // pred_fallthru
      _
    // Predicated region
    $region18: #{mlp_latent_prediction.1} parent=1 // pred_check
      _
    $region19: #{mlp_latent_prediction.1} parent=1 // pred_check_branch
      %48 = sbr.rel (0) target = $region21
    $region20: #{mlp_latent_prediction.1} parent=1 // pred_region
      _
    $region21: #{mlp_latent_prediction.1} parent=1 // pred_fallthru
      _
    // Predicated region
    $region22: #{mlp_latent_prediction.1} parent=1 // pred_check
      _
    $region23: #{mlp_latent_prediction.1} parent=1 // pred_check_branch
      %50 = sbr.rel (0) target = $region25
    $region24: #{mlp_latent_prediction.1} parent=1 // pred_region
      %52 = vsyncadd [#allocation5], 0
      %s53 = sshll.u32 %s5, 4
      %s54 = int_to_ptr.hbm [resolvable:$true] %s53
      %s55 = sshll.u32 [#allocation6], 4
      %s56 = int_to_ptr.vmem [resolvable:$true] %s55
      %61 = dma.hbm_to_vmem [thread:$0]  %s54, 1024, %s56, [#allocation5], 64, 64, 4
    $region25: #{mlp_latent_prediction.1} parent=1 // pred_fallthru
      _
    // Predicated region
    $region26: #{mlp_latent_prediction.1} parent=1 // pred_check
      _
    $region27: #{mlp_latent_prediction.1} parent=1 // pred_check_branch
      %63 = sbr.rel (0) target = $region29
    $region28: #{mlp_latent_prediction.1} parent=1 // pred_region
      _
    $region29: #{mlp_latent_prediction.1} parent=1 // pred_fallthru
      _
    // Predicated region
    $region30: #{mlp_latent_prediction.1} parent=1 // pred_check
      _
    $region31: #{mlp_latent_prediction.1} parent=1 // pred_check_branch
      %65 = sbr.rel (0) target = $region33
    $region32: #{mlp_latent_prediction.1} parent=1 // pred_region
      %67 = vsyncadd [#allocation8], 0
      %s68 = sshll.u32 %s7, 4
      %s69 = int_to_ptr.hbm [resolvable:$true] %s68
      %s70 = sshll.u32 [#allocation7], 4
      %s71 = int_to_ptr.vmem [resolvable:$true] %s70
      %76 = dma.hbm_to_vmem [thread:$0]  %s69, 1024, %s71, [#allocation8], 64, 64, 4
    $region33: #{mlp_latent_prediction.1} parent=1 // pred_fallthru
      _
    // Predicated region
    $region34: #{mlp_latent_prediction.1} parent=1 // pred_check
      _
    $region35: #{mlp_latent_prediction.1} parent=1 // pred_check_branch
      %78 = sbr.rel (0) target = $region37
    $region36: #{mlp_latent_prediction.1} parent=1 // pred_region
      _
    $region37: #{mlp_latent_prediction.1} parent=1 // pred_fallthru
      _
    // Predicated region
    $region38: #{mlp_latent_prediction.1} parent=1 // pred_check
      _
    $region39: #{mlp_latent_prediction.1} parent=1 // pred_check_branch
      %80 = sbr.rel (0) target = $region41
    $region40: #{mlp_latent_prediction.1} parent=1 // pred_region
      %82 = dma.done [#allocation3], 1024
    $region41: #{mlp_latent_prediction.1} parent=1 // pred_fallthru
      _
    // Predicated region
    $region42: #{mlp_latent_prediction.1} parent=1 // pred_check
      _
    $region43: #{mlp_latent_prediction.1} parent=1 // pred_check_branch
      %84 = sbr.rel (0) target = $region45
    $region44: #{mlp_latent_prediction.1} parent=1 // pred_region
      %86 = dma.done [#allocation5], 1024
    $region45: #{mlp_latent_prediction.1} parent=1 // pred_fallthru
      _
    // Predicated region
    $region46: #{mlp_latent_prediction.1} parent=1 // pred_check
      _
    $region47: #{mlp_latent_prediction.1} parent=1 // pred_check_branch
      %88 = sbr.rel (0) target = $region49
    $region48: #{mlp_latent_prediction.1} parent=1 // pred_region
      %90 = dma.done [#allocation5], 1024
    $region49: #{mlp_latent_prediction.1} parent=1 // pred_fallthru
      _
    // Predicated region
    $region50: #{mlp_latent_prediction.1} parent=1 // pred_check
      _
    $region51: #{mlp_latent_prediction.1} parent=1 // pred_check_branch
      %92 = sbr.rel (0) target = $region53
    $region52: #{mlp_latent_prediction.1} parent=1 // pred_region
      %94 = dma.done [#allocation8], 1024
    $region53: #{mlp_latent_prediction.1} parent=1 // pred_fallthru
      _
    %v95 = vld [vmem:[%s0] sm:$0xf]
    %v96 = vld [vmem:[%s0 + $0x4] sm:$0xf]
    %v97 = vld [vmem:[#allocation2] sm:$0xf]
    %v98 = vld [vmem:[#allocation2 + $0x4] sm:$0xf]
    %v99 = vld [vmem:[#allocation2 + $0x8] sm:$0xf]
    %v100 = vld [vmem:[#allocation2 + $0xc] sm:$0xf]
    %v101 = vld [vmem:[#allocation2 + $0x10] sm:$0xf]
    %v102 = vld [vmem:[#allocation2 + $0x14] sm:$0xf]
    %v103 = vld [vmem:[#allocation2 + $0x18] sm:$0xf]
    %v104 = vld [vmem:[#allocation2 + $0x1c] sm:$0xf]
    %v105 = vld [vmem:[#allocation2 + $0x20] sm:$0xf]
    %v106 = vld [vmem:[#allocation2 + $0x24] sm:$0xf]
    %v107 = vld [vmem:[#allocation2 + $0x28] sm:$0xf]
    %v108 = vld [vmem:[#allocation2 + $0x2c] sm:$0xf]
    %v109 = vld [vmem:[#allocation2 + $0x30] sm:$0xf]
    %v110 = vld [vmem:[#allocation2 + $0x34] sm:$0xf]
    %v111 = vld [vmem:[#allocation2 + $0x38] sm:$0xf]
    %v112 = vld [vmem:[#allocation2 + $0x3c] sm:$0xf]
    %v113 = vld [vmem:[%s2] sm:$0x1]
    %v115 = vperm.slane %v113, 0
    %v119 = vunpack.c.l.b16 %v95
    %v120 = vunpack.c.l.b16 %v96
    %v121 = vpack.c.b16 %v120, %v119
    %v139 = vunpack.c.l.b16 %v97
    %v140 = vunpack.c.l.b16 %v98
    %v141 = vunpack.c.l.b16 %v99
    %v142 = vunpack.c.l.b16 %v100
    %v143 = vunpack.c.l.b16 %v101
    %v144 = vunpack.c.l.b16 %v102
    %v145 = vunpack.c.l.b16 %v103
    %v146 = vunpack.c.l.b16 %v104
    %v147 = vunpack.c.l.b16 %v105
    %v148 = vunpack.c.l.b16 %v106
    %v149 = vunpack.c.l.b16 %v107
    %v150 = vunpack.c.l.b16 %v108
    %v151 = vunpack.c.l.b16 %v109
    %v152 = vunpack.c.l.b16 %v110
    %v153 = vunpack.c.l.b16 %v111
    %v154 = vunpack.c.l.b16 %v112
    %v155 = vpack.c.b16 %v140, %v139
    %v156 = vpack.c.b16 %v142, %v141
    %v157 = vpack.c.b16 %v144, %v143
    %v158 = vpack.c.b16 %v146, %v145
    %v159 = vpack.c.b16 %v148, %v147
    %v160 = vpack.c.b16 %v150, %v149
    %v161 = vpack.c.b16 %v152, %v151
    %v162 = vpack.c.b16 %v154, %v153
    %171 = vmatpush.bf16.msra.mxu0 %v162
    %172 = vmatpush.bf16.msra.mxu0 %v161
    %173 = vmatpush.bf16.msra.mxu0 %v160
    %174 = vmatpush.bf16.msra.mxu0 %v159
    %175 = vmatpush.bf16.msra.mxu0 %v158
    %176 = vmatpush.bf16.msra.mxu0 %v157
    %177 = vmatpush.bf16.msra.mxu0 %v156
    %178 = vmatpush.bf16.msra.mxu0 %v155
    %179 = vmatmul.bf16.gmra.mxu0 %v121
    %v180 = vpop.f32.mrf.mxu0
    %v181 = vadd.f32 %v115, %v180
    %v182 = vpop.f32.mrf.mxu0
    %v183 = vadd.f32 %v115, %v182
    %184 = vdwg.mxu0
    %v185 = vmax.f32 %v181, 0.0
    %v186 = vmax.f32 %v183, 0.0
    %v187 = vpack.c.bf16 %v186, %v185
    %v188 = vld [vmem:[#allocation4] sm:$0xf]
    %v189 = vld [vmem:[#allocation4 + $0x4] sm:$0xf]
    %v190 = vld [vmem:[#allocation4 + $0x8] sm:$0xf]
    %v191 = vld [vmem:[#allocation4 + $0xc] sm:$0xf]
    %v192 = vld [vmem:[#allocation4 + $0x10] sm:$0xf]
    %v193 = vld [vmem:[#allocation4 + $0x14] sm:$0xf]
    %v194 = vld [vmem:[#allocation4 + $0x18] sm:$0xf]
    %v195 = vld [vmem:[#allocation4 + $0x1c] sm:$0xf]
    %v196 = vld [vmem:[#allocation4 + $0x20] sm:$0xf]
    %v197 = vld [vmem:[#allocation4 + $0x24] sm:$0xf]
    %v198 = vld [vmem:[#allocation4 + $0x28] sm:$0xf]
    %v199 = vld [vmem:[#allocation4 + $0x2c] sm:$0xf]
    %v200 = vld [vmem:[#allocation4 + $0x30] sm:$0xf]
    %v201 = vld [vmem:[#allocation4 + $0x34] sm:$0xf]
    %v202 = vld [vmem:[#allocation4 + $0x38] sm:$0xf]
    %v203 = vld [vmem:[#allocation4 + $0x3c] sm:$0xf]
    %v204 = vld [vmem:[%s4] sm:$0x1]
    %v206 = vperm.slane %v204, 0
    %v224 = vunpack.c.l.b16 %v188
    %v225 = vunpack.c.l.b16 %v189
    %v226 = vunpack.c.l.b16 %v190
    %v227 = vunpack.c.l.b16 %v191
    %v228 = vunpack.c.l.b16 %v192
    %v229 = vunpack.c.l.b16 %v193
    %v230 = vunpack.c.l.b16 %v194
    %v231 = vunpack.c.l.b16 %v195
    %v232 = vunpack.c.l.b16 %v196
    %v233 = vunpack.c.l.b16 %v197
    %v234 = vunpack.c.l.b16 %v198
    %v235 = vunpack.c.l.b16 %v199
    %v236 = vunpack.c.l.b16 %v200
    %v237 = vunpack.c.l.b16 %v201
    %v238 = vunpack.c.l.b16 %v202
    %v239 = vunpack.c.l.b16 %v203
    %v240 = vpack.c.b16 %v225, %v224
    %v241 = vpack.c.b16 %v227, %v226
    %v242 = vpack.c.b16 %v229, %v228
    %v243 = vpack.c.b16 %v231, %v230
    %v244 = vpack.c.b16 %v233, %v232
    %v245 = vpack.c.b16 %v235, %v234
    %v246 = vpack.c.b16 %v237, %v236
    %v247 = vpack.c.b16 %v239, %v238
    %256 = vmatpush.bf16.msra.mxu0 %v247
    %257 = vmatpush.bf16.msra.mxu0 %v246
    %258 = vmatpush.bf16.msra.mxu0 %v245
    %259 = vmatpush.bf16.msra.mxu0 %v244
    %260 = vmatpush.bf16.msra.mxu0 %v243
    %261 = vmatpush.bf16.msra.mxu0 %v242
    %262 = vmatpush.bf16.msra.mxu0 %v241
    %263 = vmatpush.bf16.msra.mxu0 %v240
    %264 = vmatmul.bf16.gmra.mxu0 %v187
    %v265 = vpop.f32.mrf.mxu0
    %v266 = vadd.f32 %v206, %v265
    %v267 = vpop.f32.mrf.mxu0
    %v268 = vadd.f32 %v206, %v267
    %269 = vdwg.mxu0
    %v270 = vmax.f32 %v266, 0.0
    %v271 = vmax.f32 %v268, 0.0
    %v272 = vpack.c.bf16 %v271, %v270
    %v273 = vld [vmem:[#allocation6] sm:$0xf]
    %v274 = vld [vmem:[#allocation6 + $0x4] sm:$0xf]
    %v275 = vld [vmem:[#allocation6 + $0x8] sm:$0xf]
    %v276 = vld [vmem:[#allocation6 + $0xc] sm:$0xf]
    %v277 = vld [vmem:[#allocation6 + $0x10] sm:$0xf]
    %v278 = vld [vmem:[#allocation6 + $0x14] sm:$0xf]
    %v279 = vld [vmem:[#allocation6 + $0x18] sm:$0xf]
    %v280 = vld [vmem:[#allocation6 + $0x1c] sm:$0xf]
    %v281 = vld [vmem:[#allocation6 + $0x20] sm:$0xf]
    %v282 = vld [vmem:[#allocation6 + $0x24] sm:$0xf]
    %v283 = vld [vmem:[#allocation6 + $0x28] sm:$0xf]
    %v284 = vld [vmem:[#allocation6 + $0x2c] sm:$0xf]
    %v285 = vld [vmem:[#allocation6 + $0x30] sm:$0xf]
    %v286 = vld [vmem:[#allocation6 + $0x34] sm:$0xf]
    %v287 = vld [vmem:[#allocation6 + $0x38] sm:$0xf]
    %v288 = vld [vmem:[#allocation6 + $0x3c] sm:$0xf]
    %v289 = vld [vmem:[%s6] sm:$0x1]
    %v291 = vperm.slane %v289, 0
    %v309 = vunpack.c.l.b16 %v273
    %v310 = vunpack.c.l.b16 %v274
    %v311 = vunpack.c.l.b16 %v275
    %v312 = vunpack.c.l.b16 %v276
    %v313 = vunpack.c.l.b16 %v277
    %v314 = vunpack.c.l.b16 %v278
    %v315 = vunpack.c.l.b16 %v279
    %v316 = vunpack.c.l.b16 %v280
    %v317 = vunpack.c.l.b16 %v281
    %v318 = vunpack.c.l.b16 %v282
    %v319 = vunpack.c.l.b16 %v283
    %v320 = vunpack.c.l.b16 %v284
    %v321 = vunpack.c.l.b16 %v285
    %v322 = vunpack.c.l.b16 %v286
    %v323 = vunpack.c.l.b16 %v287
    %v324 = vunpack.c.l.b16 %v288
    %v325 = vpack.c.b16 %v310, %v309
    %v326 = vpack.c.b16 %v312, %v311
    %v327 = vpack.c.b16 %v314, %v313
    %v328 = vpack.c.b16 %v316, %v315
    %v329 = vpack.c.b16 %v318, %v317
    %v330 = vpack.c.b16 %v320, %v319
    %v331 = vpack.c.b16 %v322, %v321
    %v332 = vpack.c.b16 %v324, %v323
    %341 = vmatpush.bf16.msra.mxu0 %v332
    %342 = vmatpush.bf16.msra.mxu0 %v331
    %343 = vmatpush.bf16.msra.mxu0 %v330
    %344 = vmatpush.bf16.msra.mxu0 %v329
    %345 = vmatpush.bf16.msra.mxu0 %v328
    %346 = vmatpush.bf16.msra.mxu0 %v327
    %347 = vmatpush.bf16.msra.mxu0 %v326
    %348 = vmatpush.bf16.msra.mxu0 %v325
    %349 = vmatmul.bf16.gmra.mxu0 %v272
    %v350 = vpop.f32.mrf.mxu0
    %v351 = vadd.f32 %v291, %v350
    %v352 = vpop.f32.mrf.mxu0
    %v353 = vadd.f32 %v291, %v352
    %354 = vdwg.mxu0
    %v355 = vmax.f32 %v351, 0.0
    %v356 = vmax.f32 %v353, 0.0
    %v357 = vpack.c.bf16 %v356, %v355
    %v358 = vld [vmem:[#allocation7] sm:$0xf]
    %v359 = vld [vmem:[#allocation7 + $0x4] sm:$0xf]
    %v360 = vld [vmem:[#allocation7 + $0x8] sm:$0xf]
    %v361 = vld [vmem:[#allocation7 + $0xc] sm:$0xf]
    %v362 = vld [vmem:[#allocation7 + $0x10] sm:$0xf]
    %v363 = vld [vmem:[#allocation7 + $0x14] sm:$0xf]
    %v364 = vld [vmem:[#allocation7 + $0x18] sm:$0xf]
    %v365 = vld [vmem:[#allocation7 + $0x1c] sm:$0xf]
    %v366 = vld [vmem:[#allocation7 + $0x20] sm:$0xf]
    %v367 = vld [vmem:[#allocation7 + $0x24] sm:$0xf]
    %v368 = vld [vmem:[#allocation7 + $0x28] sm:$0xf]
    %v369 = vld [vmem:[#allocation7 + $0x2c] sm:$0xf]
    %v370 = vld [vmem:[#allocation7 + $0x30] sm:$0xf]
    %v371 = vld [vmem:[#allocation7 + $0x34] sm:$0xf]
    %v372 = vld [vmem:[#allocation7 + $0x38] sm:$0xf]
    %v373 = vld [vmem:[#allocation7 + $0x3c] sm:$0xf]
    %v374 = vld [vmem:[%s8] sm:$0x1]
    %v376 = vperm.slane %v374, 0
    %v394 = vunpack.c.l.b16 %v358
    %v395 = vunpack.c.l.b16 %v359
    %v396 = vunpack.c.l.b16 %v360
    %v397 = vunpack.c.l.b16 %v361
    %v398 = vunpack.c.l.b16 %v362
    %v399 = vunpack.c.l.b16 %v363
    %v400 = vunpack.c.l.b16 %v364
    %v401 = vunpack.c.l.b16 %v365
    %v402 = vunpack.c.l.b16 %v366
    %v403 = vunpack.c.l.b16 %v367
    %v404 = vunpack.c.l.b16 %v368
    %v405 = vunpack.c.l.b16 %v369
    %v406 = vunpack.c.l.b16 %v370
    %v407 = vunpack.c.l.b16 %v371
    %v408 = vunpack.c.l.b16 %v372
    %v409 = vunpack.c.l.b16 %v373
    %v410 = vpack.c.b16 %v395, %v394
    %v411 = vpack.c.b16 %v397, %v396
    %v412 = vpack.c.b16 %v399, %v398
    %v413 = vpack.c.b16 %v401, %v400
    %v414 = vpack.c.b16 %v403, %v402
    %v415 = vpack.c.b16 %v405, %v404
    %v416 = vpack.c.b16 %v407, %v406
    %v417 = vpack.c.b16 %v409, %v408
    %426 = vmatpush.bf16.msra.mxu0 %v417
    %427 = vmatpush.bf16.msra.mxu0 %v416
    %428 = vmatpush.bf16.msra.mxu0 %v415
    %429 = vmatpush.bf16.msra.mxu0 %v414
    %430 = vmatpush.bf16.msra.mxu0 %v413
    %431 = vmatpush.bf16.msra.mxu0 %v412
    %432 = vmatpush.bf16.msra.mxu0 %v411
    %433 = vmatpush.bf16.msra.mxu0 %v410
    %434 = vmatmul.bf16.gmra.mxu0 %v357
    %v435 = vpop.f32.mrf.mxu0
    %v436 = vadd.f32 %v376, %v435
    %v437 = vpop.f32.mrf.mxu0
    %v438 = vadd.f32 %v376, %v437
    %439 = vdwg.mxu0
    %440 = vst [vmem:[%s9] sm:$0xff] %v436
    %441 = vst [vmem:[%s9 + $0x8] sm:$0xff] %v438
    // Predicated region
    $region54: #{mlp_latent_prediction.1} parent=1 // pred_check
      _
    $region55: #{mlp_latent_prediction.1} parent=1 // pred_check_branch
      %443 = sbr.rel (0) target = $region57
    $region56: #{mlp_latent_prediction.1} parent=1 // pred_region
      _
    $region57: #{mlp_latent_prediction.1} parent=1 // pred_fallthru
      _
    // Predicated region
    $region58: #{mlp_latent_prediction.1} parent=1 // pred_check
      _
    $region59: #{mlp_latent_prediction.1} parent=1 // pred_check_branch
      %445 = sbr.rel (0) target = $region61
    $region60: #{mlp_latent_prediction.1} parent=1 // pred_region
      _
    $region61: #{mlp_latent_prediction.1} parent=1 // pred_fallthru
      _
    %446 = vsyncpa [#allocation3], 1
    %447 = vsyncpa [#allocation5], 1
    %448 = vsyncpa [#allocation8], 1

</llo_original>
